<compile_context>
chip_gen: v7x
topology: tpu7x:2x2x1
jax: 0.10.0
libtpu: 0.0.40
codegen_flags: <defaults>
</compile_context>

<pallas_src>
import jax
import jax.numpy as jnp
from jax.experimental import pallas as pl
from jax.experimental.pallas import tpu as pltpu

LANE = 128
DEFAULT_BATCH_TILE = 512


def _round_up(x, m):
    return (x + m - 1) // m * m


def _ncf_kernel(wmat_ref, bias_ref, itab_ref, ids_ref, user_ref, out_ref):
    """Feature-major NCF forward for one batch tile.

    wmat_ref : [2*FP, 2*FP] bf16  packed matmul weights:
                 rows 0:FP    = [W1_user^T | W1_item^T]  (merged K=2*FP first layer)
                 rows FP:2*FP = [W2^T | W3^T]
    bias_ref : [FP, 128] f32  cols: b1 | b2 | b3 | 0.5*w_gmf | 0.5*w_mlp | b_out(row 0)
    itab_ref : [FP, IP]  bf16 concat(mlp_item_emb, gmf_item_emb)^T, zero padded
    ids_ref  : [1, Bt]   int32 item ids (batch on lanes)
    user_ref : [FP, Bt]  f32  concat(mlp_user_emb, gmf_user_emb)^T, zero padded
    out_ref  : [1, Bt]   f32  logits (lane-dense)
    """
    f32, bf16 = jnp.float32, jnp.bfloat16
    FP = bias_ref.shape[0]

    # Static, tile-aligned carving of the packed weight slab.
    w1cat = wmat_ref[0:FP, :]            # [FP, 2*FP]
    w2t = wmat_ref[FP:, 0:FP]            # [FP, FP]
    w3t = wmat_ref[FP:, FP:]             # [FP, FP]

    bias = bias_ref[...]
    b1c, b2c, b3c = bias[:, 0:1], bias[:, 1:2], bias[:, 2:3]
    wgc, wmc = bias[:, 3:4], bias[:, 4:5]
    b_out = bias[0:1, 5:6]

    u = user_ref[...]                    # f32 [FP, Bt]
    ids = ids_ref[...]                   # int32 [1, Bt]

    # Fused embedding gather as a one-hot matmul on the MXU (bf16 operands, f32 acc).
    # Result rows are exactly the bf16 table rows (one-hot is exact in bf16).
    # TODO(synk): replace with scalar-prefetch / manual-DMA gather for large item tables.
    n_items = itab_ref.shape[1]
    row_id = jax.lax.broadcasted_iota(jnp.int32, (n_items, u.shape[1]), 0)
    onehot = (row_id == ids).astype(bf16)                                # [IP, Bt]
    item = jnp.dot(itab_ref[...], onehot, preferred_element_type=f32)    # [FP, Bt] f32

    # MLP tower. First layer is a single K=2*FP contraction; bias/ReLU stay f32 on the VPU.
    x = jnp.concatenate([u.astype(bf16), item.astype(bf16)], axis=0)     # [2*FP, Bt] bf16
    h = jnp.maximum(jnp.dot(w1cat, x, preferred_element_type=f32) + b1c, 0.0)
    h = jnp.maximum(jnp.dot(w2t, h.astype(bf16), preferred_element_type=f32) + b2c, 0.0)
    h = jnp.maximum(jnp.dot(w3t, h.astype(bf16), preferred_element_type=f32) + b3c, 0.0)

    # GMF path (f32 VPU) + blended output head fused into ONE cross-sublane reduce.
    # wgc is nonzero only on the gmf rows, wmc only on the live MLP-out rows, so the
    # single accumulator is exact.
    acc = (u * item) * wgc + h * wmc                                     # [FP, Bt] f32
    out_ref[...] = jnp.sum(acc, axis=0, keepdims=True) + b_out           # [1, Bt]


def pack_params(params, predictive_factor):
    """Host-side packing: one bf16 weight slab, one small f32 bias block, bf16 item table."""
    P = predictive_factor
    F = 4 * P                        # feature width of concat(mlp, gmf)
    FP = _round_up(F, LANE)          # padded feature rows
    f32, bf16 = jnp.float32, jnp.bfloat16

    def block(w_t):
        b = jnp.zeros((FP, FP), f32)
        return b.at[:w_t.shape[0], :w_t.shape[1]].set(w_t.astype(f32))

    # First layer merged along K: [W1_user^T | W1_item^T]  ([FP, 2*FP])
    w1u = block(params["w1a"].T)     # (W1[:2P])^T at top-left
    w1i = block(params["w1b"].T)     # (W1[2P:])^T
    w1cat = jnp.concatenate([w1u, w1i], axis=1)
    w23 = jnp.concatenate([block(params["w2"].T), block(params["w3"].T)], axis=1)
    wmat = jnp.concatenate([w1cat, w23], axis=0).astype(bf16)            # [2*FP, 2*FP] bf16

    bias = jnp.zeros((FP, LANE), f32)
    bias = bias.at[:2 * P, 0].set(params["b1"][0])
    bias = bias.at[:P, 1].set(params["b2"][0])
    bias = bias.at[:P // 2, 2].set(params["b3"][0])
    bias = bias.at[2 * P:4 * P, 3].set(params["w_out_gmf"][:, 0])        # blended gmf head
    bias = bias.at[:P // 2, 4].set(params["w_out_mlp"][:, 0])            # blended mlp head
    bias = bias.at[0, 5].set(params["b_out"][0, 0])

    itab = jnp.concatenate([params["mlp_item_emb"], params["gmf_item_emb"]], axis=1)  # [I, 4P]
    num_items = itab.shape[0]
    IP = _round_up(num_items, LANE)
    itab_t = (jnp.zeros((FP, IP), f32)
              .at[:F, :num_items].set(itab.T.astype(f32))
              .astype(bf16))                                             # [FP, IP] bf16

    return {"wmat": wmat, "bias": bias, "itab_t": itab_t}


def server_ncf_forward(packed, item_ids, mlp_user_emb, gmf_user_emb,
                       *, batch_tile=DEFAULT_BATCH_TILE):
    """Glue: host-side layout plumbing (concat/pad/transpose), compute in Pallas."""
    f32 = jnp.float32
    wmat, bias, itab_t = packed["wmat"], packed["bias"], packed["itab_t"]
    FP = bias.shape[0]

    B = item_ids.shape[0]
    F = mlp_user_emb.shape[1] + gmf_user_emb.shape[1]

    Bp0 = _round_up(max(B, 1), LANE)
    if Bp0 <= batch_tile:
        tile = Bp0                          # single tile -> grid-less launch
    else:
        # at least 2 tiles so the parallel grid axis can occupy both v7x TensorCores
        tile = min(batch_tile, _round_up((Bp0 + 1) // 2, LANE))
    Bp = _round_up(Bp0, tile)

    u = jnp.concatenate([mlp_user_emb.astype(f32), gmf_user_emb.astype(f32)], axis=1)
    u = jnp.pad(u, ((0, Bp - B), (0, FP - F)))
    user_t = u.T                                                     # [FP, Bp], batch on lanes
    ids = jnp.pad(item_ids.astype(jnp.int32), (0, Bp - B)).reshape(1, Bp)

    n_tiles = Bp // tile
    out_shape = jax.ShapeDtypeStruct((1, Bp), f32)

    if n_tiles == 1:
        # Single tile: no grid (no per-step bookkeeping / pointless double-buffering).
        vmem = pl.BlockSpec(memory_space=pltpu.MemorySpace.VMEM)
        out = pl.pallas_call(
            _ncf_kernel,
            out_shape=out_shape,
            in_specs=[vmem] * 5,
            out_specs=vmem,
        )(wmat, bias, itab_t, ids, user_t)
    else:
        # Large batch: tile over a parallel batch axis; constant blocks single-buffered.
        def const_spec(shape):
            return pl.BlockSpec(shape, lambda i: (0, 0), pipeline_mode=pl.Buffered(1))

        grid_spec = pl.GridSpec(
            grid=(n_tiles,),
            in_specs=[
                const_spec(wmat.shape),
                const_spec(bias.shape),
                const_spec(itab_t.shape),
                pl.BlockSpec((1, tile), lambda i: (0, i)),
                pl.BlockSpec((FP, tile), lambda i: (0, i)),
            ],
            out_specs=pl.BlockSpec((1, tile), lambda i: (0, i)),
        )
        out = pl.pallas_call(
            _ncf_kernel,
            out_shape=out_shape,
            grid_spec=grid_spec,
            compiler_params=pltpu.CompilerParams(
                dimension_semantics=("parallel",)),
        )(wmat, bias, itab_t, ids, user_t)

    return out[0, :B]


def init_params(item_num=64, predictive_factor=32, seed=0):
    """Deterministic synthetic init mirroring the PyTorch __init__/initialize_weights."""
    P = predictive_factor
    keys = jax.random.split(jax.random.PRNGKey(seed), 12)

    def xavier_uniform(key, fan_in, fan_out):
        bound = (6.0 / (fan_in + fan_out)) ** 0.5
        return jax.random.uniform(key, (fan_in, fan_out), jnp.float32, -bound, bound)

    def kaiming_uniform_a1(key, fan_in, fan_out):
        bound = (3.0 / fan_in) ** 0.5  # kaiming_uniform with a=1
        return jax.random.uniform(key, (fan_in, fan_out), jnp.float32, -bound, bound)

    def linear_bias(key, fan_in, n):
        bound = 1.0 / (fan_in ** 0.5)  # PyTorch default Linear bias init
        return jax.random.uniform(key, (1, n), jnp.float32, -bound, bound)

    mlp_item_emb = 0.01 * jax.random.normal(keys[0], (item_num, 2 * P), jnp.float32)
    gmf_item_emb = 0.01 * jax.random.normal(keys[1], (item_num, 2 * P), jnp.float32)

    w1 = xavier_uniform(keys[2], 4 * P, 2 * P)       # Linear(4P, 2P), stored [in, out]
    b1 = linear_bias(keys[3], 4 * P, 2 * P)
    w2 = xavier_uniform(keys[4], 2 * P, P)           # Linear(2P, P)
    b2 = linear_bias(keys[5], 2 * P, P)
    w3 = xavier_uniform(keys[6], P, P // 2)          # Linear(P, P//2)
    b3 = linear_bias(keys[7], P, P // 2)

    # gmf_out.weight is set to ones in __init__ then overwritten by kaiming_uniform_(a=1).
    gmf_out_w = kaiming_uniform_a1(keys[8], 2 * P, 1)   # [2P, 1]
    mlp_out_w = kaiming_uniform_a1(keys[9], P // 2, 1)  # [P//2, 1]
    out_b = linear_bias(keys[10], P, 1)                 # output_logits bias (never re-init)

    blend = 0.5  # model_blending; join_output_weights()
    return {
        "mlp_item_emb": mlp_item_emb,
        "gmf_item_emb": gmf_item_emb,
        "w1a": w1[: 2 * P], "w1b": w1[2 * P:], "b1": b1,
        "w2": w2, "b2": b2,
        "w3": w3, "b3": b3,
        "w_out_gmf": blend * gmf_out_w,
        "w_out_mlp": (1.0 - blend) * mlp_out_w,
        "b_out": out_b,  # [1, 1]
    }


def _reference(params, item_ids, mlp_user_emb, gmf_user_emb):
    """Pure-JAX f32 reference of the NCF forward."""
    mlp_item = jnp.take(params["mlp_item_emb"], item_ids, axis=0)
    gmf_item = jnp.take(params["gmf_item_emb"], item_ids, axis=0)
    h = jnp.maximum(mlp_user_emb @ params["w1a"] + mlp_item @ params["w1b"] + params["b1"], 0.0)
    h = jnp.maximum(h @ params["w2"] + params["b2"], 0.0)
    h = jnp.maximum(h @ params["w3"] + params["b3"], 0.0)
    return ((gmf_user_emb * gmf_item) @ params["w_out_gmf"]
            + h @ params["w_out_mlp"] + params["b_out"])[:, 0]


if __name__ == "__main__":
    item_num, P = 64, 32
    params = init_params(item_num=item_num, predictive_factor=P, seed=0)
    packed = pack_params(params, predictive_factor=P)

    key = jax.random.PRNGKey(0)
    # B=8   -> grid-less single 128-lane tile
    # B=300 -> grid-less single 384-lane tile
    # B=1000-> 2 x 512-lane tiles on a parallel grid axis (both TCs on v7x)
    for B in (8, 300, 1000):
        kb = jax.random.fold_in(key, B)
        k1, k2, k3 = jax.random.split(kb, 3)
        item_ids = jax.random.randint(k1, (B,), 0, item_num, dtype=jnp.int32)
        mlp_user_emb = 0.01 * jax.random.normal(k2, (B, 2 * P), jnp.float32)
        gmf_user_emb = 0.01 * jax.random.normal(k3, (B, 2 * P), jnp.float32)

        logits = server_ncf_forward(packed, item_ids, mlp_user_emb, gmf_user_emb)
        logits = jax.block_until_ready(logits)

        ref = _reference(params, item_ids, mlp_user_emb, gmf_user_emb)
        assert logits.shape == (B,)
        # bf16 MXU operands (f32 accumulation) -> loosened tolerance vs the f32 reference.
        assert jnp.allclose(logits, ref, atol=5e-3, rtol=2e-2), \
            "Pallas kernel mismatch vs JAX reference"

    # TODO(synk): the literal PyTorch forward() returns a constant 0.0 placeholder;
    # the kernel implements the NCF pipeline implied by the module's layers instead.
    print("KERNEL_OK")
</pallas_src>

<mosaic_0001>
module attributes {stable_mosaic.version = 11 : i64} {
  func.func @_ncf_kernel(%arg0: memref<256x256xbf16, #tpu.memory_space<vmem>>, %arg1: memref<128x128xf32, #tpu.memory_space<vmem>>, %arg2: memref<128x128xbf16, #tpu.memory_space<vmem>>, %arg3: memref<1x128xi32, #tpu.memory_space<vmem>>, %arg4: memref<128x128xf32, #tpu.memory_space<vmem>>, %arg5: memref<1x128xf32, #tpu.memory_space<vmem>>) attributes {dimension_semantics = [], scalar_prefetch = 0 : i64, scratch_operands = 0 : i64, tpu.core_type = #tpu.core_type<tc>} {
    %c0 = arith.constant 0 : index
    %c0_0 = arith.constant 0 : index
    %0 = vector.load %arg0[%c0, %c0_0] : memref<256x256xbf16, #tpu.memory_space<vmem>>, vector<128x256xbf16>
    %c128 = arith.constant 128 : index
    %c0_1 = arith.constant 0 : index
    %1 = vector.load %arg0[%c128, %c0_1] : memref<256x256xbf16, #tpu.memory_space<vmem>>, vector<128x128xbf16>
    %c128_2 = arith.constant 128 : index
    %c128_3 = arith.constant 128 : index
    %2 = vector.load %arg0[%c128_2, %c128_3] : memref<256x256xbf16, #tpu.memory_space<vmem>>, vector<128x128xbf16>
    %c0_4 = arith.constant 0 : index
    %c0_5 = arith.constant 0 : index
    %3 = vector.load %arg1[%c0_4, %c0_5] : memref<128x128xf32, #tpu.memory_space<vmem>>, vector<128x128xf32>
    %4 = vector.extract_strided_slice %3 {offsets = [0, 0], sizes = [128, 1], strides = [1, 1]} : vector<128x128xf32> to vector<128x1xf32>
    %5 = vector.extract_strided_slice %3 {offsets = [0, 1], sizes = [128, 1], strides = [1, 1]} : vector<128x128xf32> to vector<128x1xf32>
    %6 = vector.extract_strided_slice %3 {offsets = [0, 2], sizes = [128, 1], strides = [1, 1]} : vector<128x128xf32> to vector<128x1xf32>
    %7 = vector.extract_strided_slice %3 {offsets = [0, 3], sizes = [128, 1], strides = [1, 1]} : vector<128x128xf32> to vector<128x1xf32>
    %8 = vector.extract_strided_slice %3 {offsets = [0, 4], sizes = [128, 1], strides = [1, 1]} : vector<128x128xf32> to vector<128x1xf32>
    %9 = vector.extract_strided_slice %3 {offsets = [0, 5], sizes = [1, 1], strides = [1, 1]} : vector<128x128xf32> to vector<1x1xf32>
    %c0_6 = arith.constant 0 : index
    %c0_7 = arith.constant 0 : index
    %10 = vector.load %arg4[%c0_6, %c0_7] : memref<128x128xf32, #tpu.memory_space<vmem>>, vector<128x128xf32>
    %c0_8 = arith.constant 0 : index
    %c0_9 = arith.constant 0 : index
    %11 = vector.load %arg3[%c0_8, %c0_9] : memref<1x128xi32, #tpu.memory_space<vmem>>, vector<1x128xi32>
    %12 = tpu.iota {dimensions = array<i32: 0>} : vector<128x128xi32>
    %13 = vector.broadcast %11 : vector<1x128xi32> to vector<128x128xi32>
    %14 = arith.cmpi eq, %12, %13 : vector<128x128xi32>
    %15 = arith.extui %14 : vector<128x128xi1> to vector<128x128xi32>
    %16 = arith.sitofp %15 : vector<128x128xi32> to vector<128x128xf32>
    %17 = arith.truncf %16 : vector<128x128xf32> to vector<128x128xbf16>
    %c0_10 = arith.constant 0 : index
    %c0_11 = arith.constant 0 : index
    %18 = vector.load %arg2[%c0_10, %c0_11] : memref<128x128xbf16, #tpu.memory_space<vmem>>, vector<128x128xbf16>
    %cst = arith.constant dense<0.000000e+00> : vector<128x128xf32>
    %19 = tpu.matmul %18, %17, %cst {dimension_numbers = #tpu.dot_dimension_numbers<[1], [0], [0], [1], [0, 0, 1, 1], [], []>} : vector<128x128xbf16>, vector<128x128xbf16>, vector<128x128xf32> -> vector<128x128xf32>
    %20 = arith.truncf %10 : vector<128x128xf32> to vector<128x128xbf16>
    %21 = arith.truncf %19 : vector<128x128xf32> to vector<128x128xbf16>
    %22 = tpu.concatenate %20, %21 in 0 : vector<128x128xbf16>, vector<128x128xbf16> -> vector<256x128xbf16>
    %cst_12 = arith.constant dense<0.000000e+00> : vector<128x128xf32>
    %23 = tpu.matmul %0, %22, %cst_12 {dimension_numbers = #tpu.dot_dimension_numbers<[1], [0], [0], [1], [0, 0, 1, 1], [], []>} : vector<128x256xbf16>, vector<256x128xbf16>, vector<128x128xf32> -> vector<128x128xf32>
    %24 = vector.broadcast %4 : vector<128x1xf32> to vector<128x128xf32>
    %25 = arith.addf %23, %24 : vector<128x128xf32>
    %cst_13 = arith.constant 0.000000e+00 : f32
    %26 = vector.broadcast %cst_13 : f32 to vector<128x128xf32>
    %27 = arith.maximumf %25, %26 : vector<128x128xf32>
    %28 = arith.truncf %27 : vector<128x128xf32> to vector<128x128xbf16>
    %cst_14 = arith.constant dense<0.000000e+00> : vector<128x128xf32>
    %29 = tpu.matmul %1, %28, %cst_14 {dimension_numbers = #tpu.dot_dimension_numbers<[1], [0], [0], [1], [0, 0, 1, 1], [], []>} : vector<128x128xbf16>, vector<128x128xbf16>, vector<128x128xf32> -> vector<128x128xf32>
    %30 = vector.broadcast %5 : vector<128x1xf32> to vector<128x128xf32>
    %31 = arith.addf %29, %30 : vector<128x128xf32>
    %cst_15 = arith.constant 0.000000e+00 : f32
    %32 = vector.broadcast %cst_15 : f32 to vector<128x128xf32>
    %33 = arith.maximumf %31, %32 : vector<128x128xf32>
    %34 = arith.truncf %33 : vector<128x128xf32> to vector<128x128xbf16>
    %cst_16 = arith.constant dense<0.000000e+00> : vector<128x128xf32>
    %35 = tpu.matmul %2, %34, %cst_16 {dimension_numbers = #tpu.dot_dimension_numbers<[1], [0], [0], [1], [0, 0, 1, 1], [], []>} : vector<128x128xbf16>, vector<128x128xbf16>, vector<128x128xf32> -> vector<128x128xf32>
    %36 = vector.broadcast %6 : vector<128x1xf32> to vector<128x128xf32>
    %37 = arith.addf %35, %36 : vector<128x128xf32>
    %cst_17 = arith.constant 0.000000e+00 : f32
    %38 = vector.broadcast %cst_17 : f32 to vector<128x128xf32>
    %39 = arith.maximumf %37, %38 : vector<128x128xf32>
    %40 = arith.mulf %10, %19 : vector<128x128xf32>
    %41 = vector.broadcast %7 : vector<128x1xf32> to vector<128x128xf32>
    %42 = arith.mulf %40, %41 : vector<128x128xf32>
    %43 = vector.broadcast %8 : vector<128x1xf32> to vector<128x128xf32>
    %44 = arith.mulf %39, %43 : vector<128x128xf32>
    %45 = arith.addf %42, %44 : vector<128x128xf32>
    %cst_18 = arith.constant dense<0.000000e+00> : vector<128xf32>
    %46 = vector.multi_reduction <add>, %45, %cst_18 [0] : vector<128x128xf32> to vector<128xf32>
    %47 = vector.shape_cast %46 : vector<128xf32> to vector<1x128xf32>
    %48 = vector.broadcast %9 : vector<1x1xf32> to vector<1x128xf32>
    %49 = arith.addf %47, %48 : vector<1x128xf32>
    %c0_19 = arith.constant 0 : index
    %c0_20 = arith.constant 0 : index
    %50 = vector.load %arg5[%c0_19, %c0_20] : memref<1x128xf32, #tpu.memory_space<vmem>>, vector<1x128xf32>
    tpu.vector_store %arg5[%c0_19, %c0_20], %49 {strides = array<i32>} : memref<1x128xf32, #tpu.memory_space<vmem>>, vector<1x128xf32>,
    return
  }
}

</mosaic_0001>

<llo_original>
// kernel: tpu_custom_call.1
$region0: #{tpu_custom_call.1}
  #allocation0 [shape = 'u32[]', space=smem, size = 0x4, offset = 0x4, fixed_abs, tag = 'smem constant byte address 0x4 - core index']
  #allocation1 [shape = 'u32[144,128]{1,0:T(1,128)}', space=vmem, size = 0x12000, scoped, tag = 'internal scratch']
  %s0 = inlined_call_operand.hbm [shape: bf16[256,256], index: 0, kind: input, shape index: {}]
  %s1 = inlined_call_operand.hbm [shape: f32[128,128], index: 1, kind: input, shape index: {}]
  %s2 = inlined_call_operand.hbm [shape: bf16[128,128], index: 2, kind: input, shape index: {}]
  %s3 = inlined_call_operand.vmem [shape: s32[1,128], index: 3, kind: input, shape index: {}]
  %s4 = inlined_call_operand.hbm [shape: f32[128,128], index: 4, kind: input, shape index: {}]
  %s5 = inlined_call_operand.hbm [shape: f32[1,128], index: 5, kind: output, shape index: {}]
  %s6 = sld [smem:[#allocation0]]
  $region46: #{tpu_custom_call.1} parent=0
    _
  %s8 = ssub.s32 1, %s6
  %s9 = scalar_select 0, %s8, %s6
  $region1: #{tpu_custom_call.1} parent=0
    #allocation2 [shape = 'u8[131072]{0}', space=vmem, size = 0x20000, scoped, tag = 'input window, operand 0, single buffered']
    #allocation3 [shape = 's32[1]{0}', space=sflag, size = 0x4, scoped, tag = 'scoped memory for tpu_custom_call.1']
    #allocation4 [shape = 's32[1]{0}', space=sflag, size = 0x4, scoped, tag = 'scoped memory for tpu_custom_call.1']
    #allocation5 [shape = 'u8[65536]{0}', space=vmem, size = 0x10000, scoped, tag = 'input window, operand 1, single buffered']
    #allocation6 [shape = 's32[1]{0}', space=sflag, size = 0x4, scoped, tag = 'scoped memory for tpu_custom_call.1']
    #allocation7 [shape = 'u8[32768]{0}', space=vmem, size = 0x8000, scoped, tag = 'input window, operand 2, single buffered']
    #allocation8 [shape = 'u8[65536]{0}', space=vmem, size = 0x10000, scoped, tag = 'input window, operand 4, single buffered']
    #allocation9 [shape = 's32[1]{0}', space=sflag, size = 0x4, scoped, tag = 'scoped memory for tpu_custom_call.1']
    #allocation10 [shape = 'u8[512]{0}', space=vmem, size = 0x400, scoped, tag = 'output window, operand 0, single buffered']
    %10 = vsyncpa [#allocation3], 0
    %11 = vsyncpa [#allocation6], 0
    %12 = vsyncpa [#allocation9], 0
    %13 = vsyncpa [#allocation4], 0
    // Predicated region
    $region2: #{tpu_custom_call.1} parent=1 // pred_check
      _
    $region3: #{tpu_custom_call.1} parent=1 // pred_check_branch
      %15 = sbr.rel (0) target = $region5
    $region4: #{tpu_custom_call.1} parent=1 // pred_region
      %s17 = ssub.s32 4096, 4096
      %18 = vsyncadd [#allocation3], %s17
      %s19 = sshll.u32 [#allocation2], 4
      %s20 = int_to_ptr.vmem [resolvable:$true] %s19
      %25 = dma.hbm_to_vmem [thread:$0]  %s0, 4096, %s20, [#allocation3], 128, 128, 8
    $region5: #{tpu_custom_call.1} parent=1 // pred_fallthru
      _
    // Predicated region
    $region6: #{tpu_custom_call.1} parent=1 // pred_check
      _
    $region7: #{tpu_custom_call.1} parent=1 // pred_check_branch
      %27 = sbr.rel (0) target = $region9
    $region8: #{tpu_custom_call.1} parent=1 // pred_region
      %s29 = ssub.s32 2048, 2048
      %30 = vsyncadd [#allocation6], %s29
      %s31 = sshll.u32 [#allocation5], 4
      %s32 = int_to_ptr.vmem [resolvable:$true] %s31
      %37 = dma.hbm_to_vmem [thread:$0]  %s1, 2048, %s32, [#allocation6], 128, 128, 8
    $region9: #{tpu_custom_call.1} parent=1 // pred_fallthru
      _
    // Predicated region
    $region10: #{tpu_custom_call.1} parent=1 // pred_check
      _
    $region11: #{tpu_custom_call.1} parent=1 // pred_check_branch
      %39 = sbr.rel (0) target = $region13
    $region12: #{tpu_custom_call.1} parent=1 // pred_region
      %s41 = ssub.s32 1024, 1024
      %42 = vsyncadd [#allocation6], %s41
      %s43 = sshll.u32 [#allocation7], 4
      %s44 = int_to_ptr.vmem [resolvable:$true] %s43
      %49 = dma.hbm_to_vmem [thread:$0]  %s2, 1024, %s44, [#allocation6], 64, 64, 4
    $region13: #{tpu_custom_call.1} parent=1 // pred_fallthru
      _
    // Predicated region
    $region14: #{tpu_custom_call.1} parent=1 // pred_check
      _
    $region15: #{tpu_custom_call.1} parent=1 // pred_check_branch
      %51 = sbr.rel (0) target = $region17
    $region16: #{tpu_custom_call.1} parent=1 // pred_region
      _
    $region17: #{tpu_custom_call.1} parent=1 // pred_fallthru
      _
    // Predicated region
    $region18: #{tpu_custom_call.1} parent=1 // pred_check
      _
    $region19: #{tpu_custom_call.1} parent=1 // pred_check_branch
      %53 = sbr.rel (0) target = $region21
    $region20: #{tpu_custom_call.1} parent=1 // pred_region
      %s55 = ssub.s32 2048, 2048
      %56 = vsyncadd [#allocation9], %s55
      %s57 = sshll.u32 [#allocation8], 4
      %s58 = int_to_ptr.vmem [resolvable:$true] %s57
      %63 = dma.hbm_to_vmem [thread:$0]  %s4, 2048, %s58, [#allocation9], 128, 128, 8
    $region21: #{tpu_custom_call.1} parent=1 // pred_fallthru
      _
    // Predicated region
    $region22: #{tpu_custom_call.1} parent=1 // pred_check
      _
    $region23: #{tpu_custom_call.1} parent=1 // pred_check_branch
      %65 = sbr.rel (0) target = $region25
    $region24: #{tpu_custom_call.1} parent=1 // pred_region
      %66 = dma.done [#allocation3], 4096
    $region25: #{tpu_custom_call.1} parent=1 // pred_fallthru
      _
    // Predicated region
    $region26: #{tpu_custom_call.1} parent=1 // pred_check
      _
    $region27: #{tpu_custom_call.1} parent=1 // pred_check_branch
      %68 = sbr.rel (0) target = $region29
    $region28: #{tpu_custom_call.1} parent=1 // pred_region
      %69 = dma.done [#allocation6], 2048
    $region29: #{tpu_custom_call.1} parent=1 // pred_fallthru
      _
    // Predicated region
    $region30: #{tpu_custom_call.1} parent=1 // pred_check
      _
    $region31: #{tpu_custom_call.1} parent=1 // pred_check_branch
      %71 = sbr.rel (0) target = $region33
    $region32: #{tpu_custom_call.1} parent=1 // pred_region
      %72 = dma.done [#allocation6], 1024
    $region33: #{tpu_custom_call.1} parent=1 // pred_fallthru
      _
    // Predicated region
    $region34: #{tpu_custom_call.1} parent=1 // pred_check
      _
    $region35: #{tpu_custom_call.1} parent=1 // pred_check_branch
      %74 = sbr.rel (0) target = $region37
    $region36: #{tpu_custom_call.1} parent=1 // pred_region
      %75 = dma.done [#allocation9], 2048
    $region37: #{tpu_custom_call.1} parent=1 // pred_fallthru
      _
    %v77 = vld [vmem:[#allocation2] sm:$0xff]
    %v78 = vld [vmem:[#allocation2 + $0x8] sm:$0xff]
    %v79 = vld [vmem:[#allocation2 + $0x10] sm:$0xff]
    %v80 = vld [vmem:[#allocation2 + $0x18] sm:$0xff]
    %v81 = vld [vmem:[#allocation2 + $0x20] sm:$0xff]
    %v82 = vld [vmem:[#allocation2 + $0x28] sm:$0xff]
    %v83 = vld [vmem:[#allocation2 + $0x30] sm:$0xff]
    %v84 = vld [vmem:[#allocation2 + $0x38] sm:$0xff]
    %v85 = vld [vmem:[#allocation2 + $0x40] sm:$0xff]
    %v86 = vld [vmem:[#allocation2 + $0x48] sm:$0xff]
    %v87 = vld [vmem:[#allocation2 + $0x50] sm:$0xff]
    %v88 = vld [vmem:[#allocation2 + $0x58] sm:$0xff]
    %v89 = vld [vmem:[#allocation2 + $0x60] sm:$0xff]
    %v90 = vld [vmem:[#allocation2 + $0x68] sm:$0xff]
    %v91 = vld [vmem:[#allocation2 + $0x70] sm:$0xff]
    %v92 = vld [vmem:[#allocation2 + $0x78] sm:$0xff]
    %v93 = vld [vmem:[#allocation2 + $0x80] sm:$0xf]
    %v94 = vld [vmem:[#allocation2 + $0x88] sm:$0xf]
    %v95 = vld [vmem:[#allocation2 + $0x90] sm:$0xf]
    %v96 = vld [vmem:[#allocation2 + $0x98] sm:$0xf]
    %v97 = vld [vmem:[#allocation2 + $0xa0] sm:$0xf]
    %v98 = vld [vmem:[#allocation2 + $0xa8] sm:$0xf]
    %v99 = vld [vmem:[#allocation2 + $0xb0] sm:$0xf]
    %v100 = vld [vmem:[#allocation2 + $0xb8] sm:$0xf]
    %v101 = vld [vmem:[#allocation2 + $0xc0] sm:$0xf]
    %v102 = vld [vmem:[#allocation2 + $0xc8] sm:$0xf]
    %v103 = vld [vmem:[#allocation2 + $0xd0] sm:$0xf]
    %v104 = vld [vmem:[#allocation2 + $0xd8] sm:$0xf]
    %v105 = vld [vmem:[#allocation2 + $0xe0] sm:$0xf]
    %v106 = vld [vmem:[#allocation2 + $0xe8] sm:$0xf]
    %v107 = vld [vmem:[#allocation2 + $0xf0] sm:$0xf]
    %v108 = vld [vmem:[#allocation2 + $0xf8] sm:$0xf]
    %v109 = vld [vmem:[#allocation2 + $0x84] sm:$0xf]
    %v110 = vld [vmem:[#allocation2 + $0x8c] sm:$0xf]
    %v111 = vld [vmem:[#allocation2 + $0x94] sm:$0xf]
    %v112 = vld [vmem:[#allocation2 + $0x9c] sm:$0xf]
    %v113 = vld [vmem:[#allocation2 + $0xa4] sm:$0xf]
    %v114 = vld [vmem:[#allocation2 + $0xac] sm:$0xf]
    %v115 = vld [vmem:[#allocation2 + $0xb4] sm:$0xf]
    %v116 = vld [vmem:[#allocation2 + $0xbc] sm:$0xf]
    %v117 = vld [vmem:[#allocation2 + $0xc4] sm:$0xf]
    %v118 = vld [vmem:[#allocation2 + $0xcc] sm:$0xf]
    %v119 = vld [vmem:[#allocation2 + $0xd4] sm:$0xf]
    %v120 = vld [vmem:[#allocation2 + $0xdc] sm:$0xf]
    %v121 = vld [vmem:[#allocation2 + $0xe4] sm:$0xf]
    %v122 = vld [vmem:[#allocation2 + $0xec] sm:$0xf]
    %v123 = vld [vmem:[#allocation2 + $0xf4] sm:$0xf]
    %v124 = vld [vmem:[#allocation2 + $0xfc] sm:$0xf]
    %v125 = vld [vmem:[#allocation5] sm:$0xff]
    %v126 = vld [vmem:[#allocation5 + $0x8] sm:$0xff]
    %v127 = vld [vmem:[#allocation5 + $0x10] sm:$0xff]
    %v128 = vld [vmem:[#allocation5 + $0x18] sm:$0xff]
    %v129 = vld [vmem:[#allocation5 + $0x20] sm:$0xff]
    %v130 = vld [vmem:[#allocation5 + $0x28] sm:$0xff]
    %v131 = vld [vmem:[#allocation5 + $0x30] sm:$0xff]
    %v132 = vld [vmem:[#allocation5 + $0x38] sm:$0xff]
    %v133 = vld [vmem:[#allocation5 + $0x40] sm:$0xff]
    %v134 = vld [vmem:[#allocation5 + $0x48] sm:$0xff]
    %v135 = vld [vmem:[#allocation5 + $0x50] sm:$0xff]
    %v136 = vld [vmem:[#allocation5 + $0x58] sm:$0xff]
    %v137 = vld [vmem:[#allocation5 + $0x60] sm:$0xff]
    %v138 = vld [vmem:[#allocation5 + $0x68] sm:$0xff]
    %v139 = vld [vmem:[#allocation5 + $0x70] sm:$0xff]
    %v140 = vld [vmem:[#allocation5 + $0x78] sm:$0xff]
    %v141 = vld [vmem:[#allocation8] sm:$0xff]
    %v142 = vld [vmem:[#allocation8 + $0x8] sm:$0xff]
    %v143 = vld [vmem:[#allocation8 + $0x10] sm:$0xff]
    %v144 = vld [vmem:[#allocation8 + $0x18] sm:$0xff]
    %v145 = vld [vmem:[#allocation8 + $0x20] sm:$0xff]
    %v146 = vld [vmem:[#allocation8 + $0x28] sm:$0xff]
    %v147 = vld [vmem:[#allocation8 + $0x30] sm:$0xff]
    %v148 = vld [vmem:[#allocation8 + $0x38] sm:$0xff]
    %v149 = vld [vmem:[#allocation8 + $0x40] sm:$0xff]
    %v150 = vld [vmem:[#allocation8 + $0x48] sm:$0xff]
    %v151 = vld [vmem:[#allocation8 + $0x50] sm:$0xff]
    %v152 = vld [vmem:[#allocation8 + $0x58] sm:$0xff]
    %v153 = vld [vmem:[#allocation8 + $0x60] sm:$0xff]
    %v154 = vld [vmem:[#allocation8 + $0x68] sm:$0xff]
    %v155 = vld [vmem:[#allocation8 + $0x70] sm:$0xff]
    %v156 = vld [vmem:[#allocation8 + $0x78] sm:$0xff]
    %v157 = vld [vmem:[%s3] sm:$0x1]
    %v158 = vlaneseq
    %v159 = vshrl.u32 %v158, 7
    %v160 = vadd.s32 %v159, 8
    %v161 = vadd.s32 %v159, 16
    %v162 = vadd.s32 %v159, 24
    %v163 = vadd.s32 %v159, 32
    %v164 = vadd.s32 %v159, 40
    %v165 = vadd.s32 %v159, 48
    %v166 = vadd.s32 %v159, 56
    %v167 = vadd.s32 %v159, 64
    %v168 = vadd.s32 %v159, 72
    %v169 = vadd.s32 %v159, 80
    %v170 = vadd.s32 %v159, 88
    %v171 = vadd.s32 %v159, 96
    %v172 = vadd.s32 %v159, 104
    %v173 = vadd.s32 %v159, 112
    %v174 = vadd.s32 %v159, 120
    %v175 = vlaneseq
    %v176 = vshrl.u32 %v175, 7
    %v177 = vsub.s32 0, %v176
    %v178 = vrot.slane %v157, %v177
    %vm179 = vcmp.eq.s32.totalorder %v159, %v178
    %vm180 = vcmp.eq.s32.totalorder %v160, %v178
    %vm181 = vcmp.eq.s32.totalorder %v161, %v178
    %vm182 = vcmp.eq.s32.totalorder %v162, %v178
    %vm183 = vcmp.eq.s32.totalorder %v163, %v178
    %vm184 = vcmp.eq.s32.totalorder %v164, %v178
    %vm185 = vcmp.eq.s32.totalorder %v165, %v178
    %vm186 = vcmp.eq.s32.totalorder %v166, %v178
    %vm187 = vcmp.eq.s32.totalorder %v167, %v178
    %vm188 = vcmp.eq.s32.totalorder %v168, %v178
    %vm189 = vcmp.eq.s32.totalorder %v169, %v178
    %vm190 = vcmp.eq.s32.totalorder %v170, %v178
    %vm191 = vcmp.eq.s32.totalorder %v171, %v178
    %vm192 = vcmp.eq.s32.totalorder %v172, %v178
    %vm193 = vcmp.eq.s32.totalorder %v173, %v178
    %vm194 = vcmp.eq.s32.totalorder %v174, %v178
    %v195 = vsel %vm179, 1, 0
    %v196 = vsel %vm180, 1, 0
    %v197 = vsel %vm181, 1, 0
    %v198 = vsel %vm182, 1, 0
    %v199 = vsel %vm183, 1, 0
    %v200 = vsel %vm184, 1, 0
    %v201 = vsel %vm185, 1, 0
    %v202 = vsel %vm186, 1, 0
    %v203 = vsel %vm187, 1, 0
    %v204 = vsel %vm188, 1, 0
    %v205 = vsel %vm189, 1, 0
    %v206 = vsel %vm190, 1, 0
    %v207 = vsel %vm191, 1, 0
    %v208 = vsel %vm192, 1, 0
    %v209 = vsel %vm193, 1, 0
    %v210 = vsel %vm194, 1, 0
    %v211 = vcvt.s32.f32 %v195
    %v212 = vcvt.s32.f32 %v196
    %v213 = vcvt.s32.f32 %v197
    %v214 = vcvt.s32.f32 %v198
    %v215 = vcvt.s32.f32 %v199
    %v216 = vcvt.s32.f32 %v200
    %v217 = vcvt.s32.f32 %v201
    %v218 = vcvt.s32.f32 %v202
    %v219 = vcvt.s32.f32 %v203
    %v220 = vcvt.s32.f32 %v204
    %v221 = vcvt.s32.f32 %v205
    %v222 = vcvt.s32.f32 %v206
    %v223 = vcvt.s32.f32 %v207
    %v224 = vcvt.s32.f32 %v208
    %v225 = vcvt.s32.f32 %v209
    %v226 = vcvt.s32.f32 %v210
    %v227 = vpack.c.bf16 %v212, %v211
    %v228 = vpack.c.bf16 %v214, %v213
    %v229 = vpack.c.bf16 %v216, %v215
    %v230 = vpack.c.bf16 %v218, %v217
    %v231 = vpack.c.bf16 %v220, %v219
    %v232 = vpack.c.bf16 %v222, %v221
    %v233 = vpack.c.bf16 %v224, %v223
    %v234 = vpack.c.bf16 %v226, %v225
    %v235 = vld [vmem:[#allocation7] sm:$0xf]
    %v236 = vld [vmem:[#allocation7 + $0x4] sm:$0xf]
    %v237 = vld [vmem:[#allocation7 + $0x8] sm:$0xf]
    %v238 = vld [vmem:[#allocation7 + $0xc] sm:$0xf]
    %v239 = vld [vmem:[#allocation7 + $0x10] sm:$0xf]
    %v240 = vld [vmem:[#allocation7 + $0x14] sm:$0xf]
    %v241 = vld [vmem:[#allocation7 + $0x18] sm:$0xf]
    %v242 = vld [vmem:[#allocation7 + $0x1c] sm:$0xf]
    %v243 = vld [vmem:[#allocation7 + $0x20] sm:$0xf]
    %v244 = vld [vmem:[#allocation7 + $0x24] sm:$0xf]
    %v245 = vld [vmem:[#allocation7 + $0x28] sm:$0xf]
    %v246 = vld [vmem:[#allocation7 + $0x2c] sm:$0xf]
    %v247 = vld [vmem:[#allocation7 + $0x30] sm:$0xf]
    %v248 = vld [vmem:[#allocation7 + $0x34] sm:$0xf]
    %v249 = vld [vmem:[#allocation7 + $0x38] sm:$0xf]
    %v250 = vld [vmem:[#allocation7 + $0x3c] sm:$0xf]
    %v267 = vunpack.c.l.b16 %v235
    %v268 = vunpack.c.l.b16 %v236
    %v269 = vunpack.c.l.b16 %v237
    %v270 = vunpack.c.l.b16 %v238
    %v271 = vunpack.c.l.b16 %v239
    %v272 = vunpack.c.l.b16 %v240
    %v273 = vunpack.c.l.b16 %v241
    %v274 = vunpack.c.l.b16 %v242
    %v275 = vunpack.c.l.b16 %v243
    %v276 = vunpack.c.l.b16 %v244
    %v277 = vunpack.c.l.b16 %v245
    %v278 = vunpack.c.l.b16 %v246
    %v279 = vunpack.c.l.b16 %v247
    %v280 = vunpack.c.l.b16 %v248
    %v281 = vunpack.c.l.b16 %v249
    %v282 = vunpack.c.l.b16 %v250
    %v283 = vpack.c.b16 %v268, %v267
    %v284 = vpack.c.b16 %v270, %v269
    %v285 = vpack.c.b16 %v272, %v271
    %v286 = vpack.c.b16 %v274, %v273
    %v287 = vpack.c.b16 %v276, %v275
    %v288 = vpack.c.b16 %v278, %v277
    %v289 = vpack.c.b16 %v280, %v279
    %v290 = vpack.c.b16 %v282, %v281
    %299 = vmatprep.subr.bf16.mxu0 0
    %300 = vmatpush1.bf16.msra.mxu0 %v227
    %301 = vmatprep.subr.bf16.mxu0 0
    %302 = vmatpush1.bf16.msra.mxu0 %v228
    %303 = vmatprep.subr.bf16.mxu0 0
    %304 = vmatpush1.bf16.msra.mxu0 %v229
    %305 = vmatprep.subr.bf16.mxu0 0
    %306 = vmatpush1.bf16.msra.mxu0 %v230
    %307 = vmatprep.subr.bf16.mxu0 0
    %308 = vmatpush1.bf16.msra.mxu0 %v231
    %309 = vmatprep.subr.bf16.mxu0 0
    %310 = vmatpush1.bf16.msra.mxu0 %v232
    %311 = vmatprep.subr.bf16.mxu0 0
    %312 = vmatpush1.bf16.msra.mxu0 %v233
    %313 = vmatprep.subr.bf16.mxu0 0
    %314 = vmatpush1.bf16.msra.mxu0 %v234
    %315 = vmatprep.subr.bf16.mxu0 0
    %316 = vmatpush1.bf16.msra.mxu0 0
    %317 = vmatprep.subr.bf16.mxu0 0
    %318 = vmatpush1.bf16.msra.mxu0 0
    %319 = vmatprep.subr.bf16.mxu0 0
    %320 = vmatpush1.bf16.msra.mxu0 0
    %321 = vmatprep.subr.bf16.mxu0 0
    %322 = vmatpush1.bf16.msra.mxu0 0
    %323 = vmatprep.subr.bf16.mxu0 0
    %324 = vmatpush1.bf16.msra.mxu0 0
    %325 = vmatprep.subr.bf16.mxu0 0
    %326 = vmatpush1.bf16.msra.mxu0 0
    %327 = vmatprep.subr.bf16.mxu0 0
    %328 = vmatpush1.bf16.msra.mxu0 0
    %329 = vmatprep.subr.bf16.mxu0 0
    %330 = vmatpush1.bf16.msra.mxu0 0
    %331 = vmatprep.mubr.bf16.mxu0 0
    %332 = vmatmul.mubr.bf16.gmra.mrb[0].mxu0 %v283
    %v333 = vpop.f32.mrb[0].mxu0
    %v334 = vadd.f32 0.0, %v333
    %v335 = vpop.f32.mrb[0].mxu0
    %v336 = vpop.f32.mrb[0].mxu0
    %v337 = vadd.f32 0.0, %v336
    %v338 = vpop.f32.mrb[0].mxu0
    %339 = vmatprep.mubr.bf16.mxu0 0
    %340 = vmatmul.mubr.bf16.gmra.mrb[0].mxu0 %v284
    %v341 = vpop.f32.mrb[0].mxu0
    %v342 = vadd.f32 0.0, %v341
    %v343 = vpop.f32.mrb[0].mxu0
    %v344 = vpop.f32.mrb[0].mxu0
    %v345 = vadd.f32 0.0, %v344
    %v346 = vpop.f32.mrb[0].mxu0
    %347 = vmatprep.mubr.bf16.mxu0 0
    %348 = vmatmul.mubr.bf16.gmra.mrb[0].mxu0 %v285
    %v349 = vpop.f32.mrb[0].mxu0
    %v350 = vadd.f32 0.0, %v349
    %v351 = vpop.f32.mrb[0].mxu0
    %v352 = vpop.f32.mrb[0].mxu0
    %v353 = vadd.f32 0.0, %v352
    %v354 = vpop.f32.mrb[0].mxu0
    %355 = vmatprep.mubr.bf16.mxu0 0
    %356 = vmatmul.mubr.bf16.gmra.mrb[0].mxu0 %v286
    %v357 = vpop.f32.mrb[0].mxu0
    %v358 = vadd.f32 0.0, %v357
    %v359 = vpop.f32.mrb[0].mxu0
    %v360 = vpop.f32.mrb[0].mxu0
    %v361 = vadd.f32 0.0, %v360
    %v362 = vpop.f32.mrb[0].mxu0
    %363 = vmatprep.mubr.bf16.mxu0 0
    %364 = vmatmul.mubr.bf16.gmra.mrb[0].mxu0 %v287
    %v365 = vpop.f32.mrb[0].mxu0
    %v366 = vadd.f32 0.0, %v365
    %v367 = vpop.f32.mrb[0].mxu0
    %v368 = vpop.f32.mrb[0].mxu0
    %v369 = vadd.f32 0.0, %v368
    %v370 = vpop.f32.mrb[0].mxu0
    %371 = vmatprep.mubr.bf16.mxu0 0
    %372 = vmatmul.mubr.bf16.gmra.mrb[0].mxu0 %v288
    %v373 = vpop.f32.mrb[0].mxu0
    %v374 = vadd.f32 0.0, %v373
    %v375 = vpop.f32.mrb[0].mxu0
    %v376 = vpop.f32.mrb[0].mxu0
    %v377 = vadd.f32 0.0, %v376
    %v378 = vpop.f32.mrb[0].mxu0
    %379 = vmatprep.mubr.bf16.mxu0 0
    %380 = vmatmul.mubr.bf16.gmra.mrb[0].mxu0 %v289
    %v381 = vpop.f32.mrb[0].mxu0
    %v382 = vadd.f32 0.0, %v381
    %v383 = vpop.f32.mrb[0].mxu0
    %v384 = vpop.f32.mrb[0].mxu0
    %v385 = vadd.f32 0.0, %v384
    %v386 = vpop.f32.mrb[0].mxu0
    %387 = vmatprep.mubr.bf16.mxu0 0
    %388 = vmatmul.mubr.bf16.gmra.mrb[0].mxu0 %v290
    %v389 = vpop.f32.mrb[0].mxu0
    %v390 = vadd.f32 0.0, %v389
    %v391 = vpop.f32.mrb[0].mxu0
    %v392 = vpop.f32.mrb[0].mxu0
    %v393 = vadd.f32 0.0, %v392
    %v394 = vpop.f32.mrb[0].mxu0
    %395 = vdwg.mxu0
    %v396 = vpack.c.bf16 %v142, %v141
    %v397 = vpack.c.bf16 %v144, %v143
    %v398 = vpack.c.bf16 %v146, %v145
    %v399 = vpack.c.bf16 %v148, %v147
    %v400 = vpack.c.bf16 %v150, %v149
    %v401 = vpack.c.bf16 %v152, %v151
    %v402 = vpack.c.bf16 %v154, %v153
    %v403 = vpack.c.bf16 %v156, %v155
    %v404 = vpack.c.bf16 %v337, %v334
    %v405 = vpack.c.bf16 %v345, %v342
    %v406 = vpack.c.bf16 %v353, %v350
    %v407 = vpack.c.bf16 %v361, %v358
    %v408 = vpack.c.bf16 %v369, %v366
    %v409 = vpack.c.bf16 %v377, %v374
    %v410 = vpack.c.bf16 %v385, %v382
    %v411 = vpack.c.bf16 %v393, %v390
    %413 = vset.pattern.permute.xlu0 0
    %414 = vperm.xlu0 %413, %v125
    %v415 = vpop.permute.xlu0 %414
    %418 = vset.pattern.permute.xlu0 0
    %419 = vperm.xlu0 %418, %v126
    %v420 = vpop.permute.xlu0 %419
    %423 = vset.pattern.permute.xlu0 0
    %424 = vperm.xlu0 %423, %v127
    %v425 = vpop.permute.xlu0 %424
    %428 = vset.pattern.permute.xlu0 0
    %429 = vperm.xlu0 %428, %v128
    %v430 = vpop.permute.xlu0 %429
    %433 = vset.pattern.permute.xlu0 0
    %434 = vperm.xlu0 %433, %v129
    %v435 = vpop.permute.xlu0 %434
    %438 = vset.pattern.permute.xlu0 0
    %439 = vperm.xlu0 %438, %v130
    %v440 = vpop.permute.xlu0 %439
    %443 = vset.pattern.permute.xlu0 0
    %444 = vperm.xlu0 %443, %v131
    %v445 = vpop.permute.xlu0 %444
    %448 = vset.pattern.permute.xlu0 0
    %449 = vperm.xlu0 %448, %v132
    %v450 = vpop.permute.xlu0 %449
    %453 = vset.pattern.permute.xlu0 0
    %454 = vperm.xlu0 %453, %v133
    %v455 = vpop.permute.xlu0 %454
    %458 = vset.pattern.permute.xlu0 0
    %459 = vperm.xlu0 %458, %v134
    %v460 = vpop.permute.xlu0 %459
    %463 = vset.pattern.permute.xlu0 0
    %464 = vperm.xlu0 %463, %v135
    %v465 = vpop.permute.xlu0 %464
    %468 = vset.pattern.permute.xlu0 0
    %469 = vperm.xlu0 %468, %v136
    %v470 = vpop.permute.xlu0 %469
    %473 = vset.pattern.permute.xlu0 0
    %474 = vperm.xlu0 %473, %v137
    %v475 = vpop.permute.xlu0 %474
    %478 = vset.pattern.permute.xlu0 0
    %479 = vperm.xlu0 %478, %v138
    %v480 = vpop.permute.xlu0 %479
    %483 = vset.pattern.permute.xlu0 0
    %484 = vperm.xlu0 %483, %v139
    %v485 = vpop.permute.xlu0 %484
    %488 = vset.pattern.permute.xlu0 0
    %489 = vperm.xlu0 %488, %v140
    %v490 = vpop.permute.xlu0 %489
    %v508 = vunpack.c.l.b16 %v77
    %v509 = vunpack.c.h.b16 %v77
    %v510 = vunpack.c.l.b16 %v78
    %v511 = vunpack.c.h.b16 %v78
    %v512 = vunpack.c.l.b16 %v79
    %v513 = vunpack.c.h.b16 %v79
    %v514 = vunpack.c.l.b16 %v80
    %v515 = vunpack.c.h.b16 %v80
    %v516 = vunpack.c.l.b16 %v81
    %v517 = vunpack.c.h.b16 %v81
    %v518 = vunpack.c.l.b16 %v82
    %v519 = vunpack.c.h.b16 %v82
    %v520 = vunpack.c.l.b16 %v83
    %v521 = vunpack.c.h.b16 %v83
    %v522 = vunpack.c.l.b16 %v84
    %v523 = vunpack.c.h.b16 %v84
    %v524 = vunpack.c.l.b16 %v85
    %v525 = vunpack.c.h.b16 %v85
    %v526 = vunpack.c.l.b16 %v86
    %v527 = vunpack.c.h.b16 %v86
    %v528 = vunpack.c.l.b16 %v87
    %v529 = vunpack.c.h.b16 %v87
    %v530 = vunpack.c.l.b16 %v88
    %v531 = vunpack.c.h.b16 %v88
    %v532 = vunpack.c.l.b16 %v89
    %v533 = vunpack.c.h.b16 %v89
    %v534 = vunpack.c.l.b16 %v90
    %v535 = vunpack.c.h.b16 %v90
    %v536 = vunpack.c.l.b16 %v91
    %v537 = vunpack.c.h.b16 %v91
    %v538 = vunpack.c.l.b16 %v92
    %v539 = vunpack.c.h.b16 %v92
    %v540 = vpack.c.b16 %v510, %v508
    %v541 = vpack.c.b16 %v511, %v509
    %v542 = vpack.c.b16 %v514, %v512
    %v543 = vpack.c.b16 %v515, %v513
    %v544 = vpack.c.b16 %v518, %v516
    %v545 = vpack.c.b16 %v519, %v517
    %v546 = vpack.c.b16 %v522, %v520
    %v547 = vpack.c.b16 %v523, %v521
    %v548 = vpack.c.b16 %v526, %v524
    %v549 = vpack.c.b16 %v527, %v525
    %v550 = vpack.c.b16 %v530, %v528
    %v551 = vpack.c.b16 %v531, %v529
    %v552 = vpack.c.b16 %v534, %v532
    %v553 = vpack.c.b16 %v535, %v533
    %v554 = vpack.c.b16 %v538, %v536
    %v555 = vpack.c.b16 %v539, %v537
    %572 = vmatprep.subr.bf16.mxu0 0
    %573 = vmatpush1.bf16.msra.mxu0 %v396
    %574 = vmatprep.subr.bf16.mxu0 0
    %575 = vmatpush1.bf16.msra.mxu0 %v397
    %576 = vmatprep.subr.bf16.mxu0 0
    %577 = vmatpush1.bf16.msra.mxu0 %v398
    %578 = vmatprep.subr.bf16.mxu0 0
    %579 = vmatpush1.bf16.msra.mxu0 %v399
    %580 = vmatprep.subr.bf16.mxu0 0
    %581 = vmatpush1.bf16.msra.mxu0 %v400
    %582 = vmatprep.subr.bf16.mxu0 0
    %583 = vmatpush1.bf16.msra.mxu0 %v401
    %584 = vmatprep.subr.bf16.mxu0 0
    %585 = vmatpush1.bf16.msra.mxu0 %v402
    %586 = vmatprep.subr.bf16.mxu0 0
    %587 = vmatpush1.bf16.msra.mxu0 %v403
    %588 = vmatprep.subr.bf16.mxu0 0
    %589 = vmatpush1.bf16.msra.mxu0 %v404
    %590 = vmatprep.subr.bf16.mxu0 0
    %591 = vmatpush1.bf16.msra.mxu0 %v405
    %592 = vmatprep.subr.bf16.mxu0 0
    %593 = vmatpush1.bf16.msra.mxu0 %v406
    %594 = vmatprep.subr.bf16.mxu0 0
    %595 = vmatpush1.bf16.msra.mxu0 %v407
    %596 = vmatprep.subr.bf16.mxu0 0
    %597 = vmatpush1.bf16.msra.mxu0 %v408
    %598 = vmatprep.subr.bf16.mxu0 0
    %599 = vmatpush1.bf16.msra.mxu0 %v409
    %600 = vmatprep.subr.bf16.mxu0 0
    %601 = vmatpush1.bf16.msra.mxu0 %v410
    %602 = vmatprep.subr.bf16.mxu0 0
    %603 = vmatpush1.bf16.msra.mxu0 %v411
    %604 = vmatprep.mubr.bf16.mxu0 %v541
    %605 = vmatmul.mubr.bf16.gmra.mrb[0].mxu0 %v540
    %v606 = vpop.f32.mrb[0].mxu0
    %v607 = vadd.f32 %v415, %v606
    %v608 = vpop.f32.mrb[0].mxu0
    %v609 = vpop.f32.mrb[0].mxu0
    %v610 = vadd.f32 %v420, %v609
    %v611 = vpop.f32.mrb[0].mxu0
    %612 = vmatprep.mubr.bf16.mxu0 %v543
    %613 = vmatmul.mubr.bf16.gmra.mrb[0].mxu0 %v542
    %v614 = vpop.f32.mrb[0].mxu0
    %v615 = vadd.f32 %v425, %v614
    %v616 = vpop.f32.mrb[0].mxu0
    %v617 = vpop.f32.mrb[0].mxu0
    %v618 = vadd.f32 %v430, %v617
    %v619 = vpop.f32.mrb[0].mxu0
    %620 = vmatprep.mubr.bf16.mxu0 %v545
    %621 = vmatmul.mubr.bf16.gmra.mrb[0].mxu0 %v544
    %v622 = vpop.f32.mrb[0].mxu0
    %v623 = vadd.f32 %v435, %v622
    %v624 = vpop.f32.mrb[0].mxu0
    %v625 = vpop.f32.mrb[0].mxu0
    %v626 = vadd.f32 %v440, %v625
    %v627 = vpop.f32.mrb[0].mxu0
    %628 = vmatprep.mubr.bf16.mxu0 %v547
    %629 = vmatmul.mubr.bf16.gmra.mrb[0].mxu0 %v546
    %v630 = vpop.f32.mrb[0].mxu0
    %v631 = vadd.f32 %v445, %v630
    %v632 = vpop.f32.mrb[0].mxu0
    %v633 = vpop.f32.mrb[0].mxu0
    %v634 = vadd.f32 %v450, %v633
    %v635 = vpop.f32.mrb[0].mxu0
    %636 = vmatprep.mubr.bf16.mxu0 %v549
    %637 = vmatmul.mubr.bf16.gmra.mrb[0].mxu0 %v548
    %v638 = vpop.f32.mrb[0].mxu0
    %v639 = vadd.f32 %v455, %v638
    %v640 = vpop.f32.mrb[0].mxu0
    %v641 = vpop.f32.mrb[0].mxu0
    %v642 = vadd.f32 %v460, %v641
    %v643 = vpop.f32.mrb[0].mxu0
    %644 = vmatprep.mubr.bf16.mxu0 %v551
    %645 = vmatmul.mubr.bf16.gmra.mrb[0].mxu0 %v550
    %v646 = vpop.f32.mrb[0].mxu0
    %v647 = vadd.f32 %v465, %v646
    %v648 = vpop.f32.mrb[0].mxu0
    %v649 = vpop.f32.mrb[0].mxu0
    %v650 = vadd.f32 %v470, %v649
    %v651 = vpop.f32.mrb[0].mxu0
    %652 = vmatprep.mubr.bf16.mxu0 %v553
    %653 = vmatmul.mubr.bf16.gmra.mrb[0].mxu0 %v552
    %v654 = vpop.f32.mrb[0].mxu0
    %v655 = vadd.f32 %v475, %v654
    %v656 = vpop.f32.mrb[0].mxu0
    %v657 = vpop.f32.mrb[0].mxu0
    %v658 = vadd.f32 %v480, %v657
    %v659 = vpop.f32.mrb[0].mxu0
    %660 = vmatprep.mubr.bf16.mxu0 %v555
    %661 = vmatmul.mubr.bf16.gmra.mrb[0].mxu0 %v554
    %v662 = vpop.f32.mrb[0].mxu0
    %v663 = vadd.f32 %v485, %v662
    %v664 = vpop.f32.mrb[0].mxu0
    %v665 = vpop.f32.mrb[0].mxu0
    %v666 = vadd.f32 %v490, %v665
    %v667 = vpop.f32.mrb[0].mxu0
    %668 = vdwg.mxu0
    %v669 = vmax.f32 %v607, 0.0
    %v670 = vmax.f32 %v610, 0.0
    %v671 = vmax.f32 %v615, 0.0
    %v672 = vmax.f32 %v618, 0.0
    %v673 = vmax.f32 %v623, 0.0
    %v674 = vmax.f32 %v626, 0.0
    %v675 = vmax.f32 %v631, 0.0
    %v676 = vmax.f32 %v634, 0.0
    %v677 = vmax.f32 %v639, 0.0
    %v678 = vmax.f32 %v642, 0.0
    %v679 = vmax.f32 %v647, 0.0
    %v680 = vmax.f32 %v650, 0.0
    %v681 = vmax.f32 %v655, 0.0
    %v682 = vmax.f32 %v658, 0.0
    %v683 = vmax.f32 %v663, 0.0
    %v684 = vmax.f32 %v666, 0.0
    %v685 = vpack.c.bf16 %v670, %v669
    %v686 = vpack.c.bf16 %v672, %v671
    %v687 = vpack.c.bf16 %v674, %v673
    %v688 = vpack.c.bf16 %v676, %v675
    %v689 = vpack.c.bf16 %v678, %v677
    %v690 = vpack.c.bf16 %v680, %v679
    %v691 = vpack.c.bf16 %v682, %v681
    %v692 = vpack.c.bf16 %v684, %v683
    %693 = vset.pattern.permute.xlu0 1
    %694 = vperm.xlu0 %693, %v125
    %v695 = vpop.permute.xlu0 %694
    %697 = vset.pattern.permute.xlu0 1
    %698 = vperm.xlu0 %697, %v126
    %v699 = vpop.permute.xlu0 %698
    %701 = vset.pattern.permute.xlu0 1
    %702 = vperm.xlu0 %701, %v127
    %v703 = vpop.permute.xlu0 %702
    %705 = vset.pattern.permute.xlu0 1
    %706 = vperm.xlu0 %705, %v128
    %v707 = vpop.permute.xlu0 %706
    %709 = vset.pattern.permute.xlu0 1
    %710 = vperm.xlu0 %709, %v129
    %v711 = vpop.permute.xlu0 %710
    %713 = vset.pattern.permute.xlu0 1
    %714 = vperm.xlu0 %713, %v130
    %v715 = vpop.permute.xlu0 %714
    %717 = vset.pattern.permute.xlu0 1
    %718 = vperm.xlu0 %717, %v131
    %v719 = vpop.permute.xlu0 %718
    %721 = vset.pattern.permute.xlu0 1
    %722 = vperm.xlu0 %721, %v132
    %v723 = vpop.permute.xlu0 %722
    %725 = vset.pattern.permute.xlu0 1
    %726 = vperm.xlu0 %725, %v133
    %v727 = vpop.permute.xlu0 %726
    %729 = vset.pattern.permute.xlu0 1
    %730 = vperm.xlu0 %729, %v134
    %v731 = vpop.permute.xlu0 %730
    %733 = vset.pattern.permute.xlu0 1
    %734 = vperm.xlu0 %733, %v135
    %v735 = vpop.permute.xlu0 %734
    %737 = vset.pattern.permute.xlu0 1
    %738 = vperm.xlu0 %737, %v136
    %v739 = vpop.permute.xlu0 %738
    %741 = vset.pattern.permute.xlu0 1
    %742 = vperm.xlu0 %741, %v137
    %v743 = vpop.permute.xlu0 %742
    %745 = vset.pattern.permute.xlu0 1
    %746 = vperm.xlu0 %745, %v138
    %v747 = vpop.permute.xlu0 %746
    %749 = vset.pattern.permute.xlu0 1
    %750 = vperm.xlu0 %749, %v139
    %v751 = vpop.permute.xlu0 %750
    %753 = vset.pattern.permute.xlu0 1
    %754 = vperm.xlu0 %753, %v140
    %v755 = vpop.permute.xlu0 %754
    %v773 = vunpack.c.l.b16 %v93
    %v774 = vunpack.c.l.b16 %v94
    %v775 = vunpack.c.l.b16 %v95
    %v776 = vunpack.c.l.b16 %v96
    %v777 = vunpack.c.l.b16 %v97
    %v778 = vunpack.c.l.b16 %v98
    %v779 = vunpack.c.l.b16 %v99
    %v780 = vunpack.c.l.b16 %v100
    %v781 = vunpack.c.l.b16 %v101
    %v782 = vunpack.c.l.b16 %v102
    %v783 = vunpack.c.l.b16 %v103
    %v784 = vunpack.c.l.b16 %v104
    %v785 = vunpack.c.l.b16 %v105
    %v786 = vunpack.c.l.b16 %v106
    %v787 = vunpack.c.l.b16 %v107
    %v788 = vunpack.c.l.b16 %v108
    %v789 = vpack.c.b16 %v774, %v773
    %v790 = vpack.c.b16 %v776, %v775
    %v791 = vpack.c.b16 %v778, %v777
    %v792 = vpack.c.b16 %v780, %v779
    %v793 = vpack.c.b16 %v782, %v781
    %v794 = vpack.c.b16 %v784, %v783
    %v795 = vpack.c.b16 %v786, %v785
    %v796 = vpack.c.b16 %v788, %v787
    %805 = vmatprep.subr.bf16.mxu0 0
    %806 = vmatpush1.bf16.msra.mxu0 %v685
    %807 = vmatprep.subr.bf16.mxu0 0
    %808 = vmatpush1.bf16.msra.mxu0 %v686
    %809 = vmatprep.subr.bf16.mxu0 0
    %810 = vmatpush1.bf16.msra.mxu0 %v687
    %811 = vmatprep.subr.bf16.mxu0 0
    %812 = vmatpush1.bf16.msra.mxu0 %v688
    %813 = vmatprep.subr.bf16.mxu0 0
    %814 = vmatpush1.bf16.msra.mxu0 %v689
    %815 = vmatprep.subr.bf16.mxu0 0
    %816 = vmatpush1.bf16.msra.mxu0 %v690
    %817 = vmatprep.subr.bf16.mxu0 0
    %818 = vmatpush1.bf16.msra.mxu0 %v691
    %819 = vmatprep.subr.bf16.mxu0 0
    %820 = vmatpush1.bf16.msra.mxu0 %v692
    %821 = vmatprep.subr.bf16.mxu0 0
    %822 = vmatpush1.bf16.msra.mxu0 0
    %823 = vmatprep.subr.bf16.mxu0 0
    %824 = vmatpush1.bf16.msra.mxu0 0
    %825 = vmatprep.subr.bf16.mxu0 0
    %826 = vmatpush1.bf16.msra.mxu0 0
    %827 = vmatprep.subr.bf16.mxu0 0
    %828 = vmatpush1.bf16.msra.mxu0 0
    %829 = vmatprep.subr.bf16.mxu0 0
    %830 = vmatpush1.bf16.msra.mxu0 0
    %831 = vmatprep.subr.bf16.mxu0 0
    %832 = vmatpush1.bf16.msra.mxu0 0
    %833 = vmatprep.subr.bf16.mxu0 0
    %834 = vmatpush1.bf16.msra.mxu0 0
    %835 = vmatprep.subr.bf16.mxu0 0
    %836 = vmatpush1.bf16.msra.mxu0 0
    %837 = vmatprep.mubr.bf16.mxu0 0
    %838 = vmatmul.mubr.bf16.gmra.mrb[0].mxu0 %v789
    %v839 = vpop.f32.mrb[0].mxu0
    %v840 = vadd.f32 %v695, %v839
    %v841 = vpop.f32.mrb[0].mxu0
    %v842 = vpop.f32.mrb[0].mxu0
    %v843 = vadd.f32 %v699, %v842
    %v844 = vpop.f32.mrb[0].mxu0
    %845 = vmatprep.mubr.bf16.mxu0 0
    %846 = vmatmul.mubr.bf16.gmra.mrb[0].mxu0 %v790
    %v847 = vpop.f32.mrb[0].mxu0
    %v848 = vadd.f32 %v703, %v847
    %v849 = vpop.f32.mrb[0].mxu0
    %v850 = vpop.f32.mrb[0].mxu0
    %v851 = vadd.f32 %v707, %v850
    %v852 = vpop.f32.mrb[0].mxu0
    %853 = vmatprep.mubr.bf16.mxu0 0
    %854 = vmatmul.mubr.bf16.gmra.mrb[0].mxu0 %v791
    %v855 = vpop.f32.mrb[0].mxu0
    %v856 = vadd.f32 %v711, %v855
    %v857 = vpop.f32.mrb[0].mxu0
    %v858 = vpop.f32.mrb[0].mxu0
    %v859 = vadd.f32 %v715, %v858
    %v860 = vpop.f32.mrb[0].mxu0
    %861 = vmatprep.mubr.bf16.mxu0 0
    %862 = vmatmul.mubr.bf16.gmra.mrb[0].mxu0 %v792
    %v863 = vpop.f32.mrb[0].mxu0
    %v864 = vadd.f32 %v719, %v863
    %v865 = vpop.f32.mrb[0].mxu0
    %v866 = vpop.f32.mrb[0].mxu0
    %v867 = vadd.f32 %v723, %v866
    %v868 = vpop.f32.mrb[0].mxu0
    %869 = vmatprep.mubr.bf16.mxu0 0
    %870 = vmatmul.mubr.bf16.gmra.mrb[0].mxu0 %v793
    %v871 = vpop.f32.mrb[0].mxu0
    %v872 = vadd.f32 %v727, %v871
    %v873 = vpop.f32.mrb[0].mxu0
    %v874 = vpop.f32.mrb[0].mxu0
    %v875 = vadd.f32 %v731, %v874
    %v876 = vpop.f32.mrb[0].mxu0
    %877 = vmatprep.mubr.bf16.mxu0 0
    %878 = vmatmul.mubr.bf16.gmra.mrb[0].mxu0 %v794
    %v879 = vpop.f32.mrb[0].mxu0
    %v880 = vadd.f32 %v735, %v879
    %v881 = vpop.f32.mrb[0].mxu0
    %v882 = vpop.f32.mrb[0].mxu0
    %v883 = vadd.f32 %v739, %v882
    %v884 = vpop.f32.mrb[0].mxu0
    %885 = vmatprep.mubr.bf16.mxu0 0
    %886 = vmatmul.mubr.bf16.gmra.mrb[0].mxu0 %v795
    %v887 = vpop.f32.mrb[0].mxu0
    %v888 = vadd.f32 %v743, %v887
    %v889 = vpop.f32.mrb[0].mxu0
    %v890 = vpop.f32.mrb[0].mxu0
    %v891 = vadd.f32 %v747, %v890
    %v892 = vpop.f32.mrb[0].mxu0
    %893 = vmatprep.mubr.bf16.mxu0 0
    %894 = vmatmul.mubr.bf16.gmra.mrb[0].mxu0 %v796
    %v895 = vpop.f32.mrb[0].mxu0
    %v896 = vadd.f32 %v751, %v895
    %v897 = vpop.f32.mrb[0].mxu0
    %v898 = vpop.f32.mrb[0].mxu0
    %v899 = vadd.f32 %v755, %v898
    %v900 = vpop.f32.mrb[0].mxu0
    %901 = vdwg.mxu0
    %v902 = vmax.f32 %v840, 0.0
    %v903 = vmax.f32 %v843, 0.0
    %v904 = vmax.f32 %v848, 0.0
    %v905 = vmax.f32 %v851, 0.0
    %v906 = vmax.f32 %v856, 0.0
    %v907 = vmax.f32 %v859, 0.0
    %v908 = vmax.f32 %v864, 0.0
    %v909 = vmax.f32 %v867, 0.0
    %v910 = vmax.f32 %v872, 0.0
    %v911 = vmax.f32 %v875, 0.0
    %v912 = vmax.f32 %v880, 0.0
    %v913 = vmax.f32 %v883, 0.0
    %v914 = vmax.f32 %v888, 0.0
    %v915 = vmax.f32 %v891, 0.0
    %v916 = vmax.f32 %v896, 0.0
    %v917 = vmax.f32 %v899, 0.0
    %v918 = vpack.c.bf16 %v903, %v902
    %v919 = vpack.c.bf16 %v905, %v904
    %v920 = vpack.c.bf16 %v907, %v906
    %v921 = vpack.c.bf16 %v909, %v908
    %v922 = vpack.c.bf16 %v911, %v910
    %v923 = vpack.c.bf16 %v913, %v912
    %v924 = vpack.c.bf16 %v915, %v914
    %v925 = vpack.c.bf16 %v917, %v916
    %926 = vset.pattern.permute.xlu0 2
    %927 = vperm.xlu0 %926, %v125
    %v928 = vpop.permute.xlu0 %927
    %930 = vset.pattern.permute.xlu0 2
    %931 = vperm.xlu0 %930, %v126
    %v932 = vpop.permute.xlu0 %931
    %934 = vset.pattern.permute.xlu0 2
    %935 = vperm.xlu0 %934, %v127
    %v936 = vpop.permute.xlu0 %935
    %938 = vset.pattern.permute.xlu0 2
    %939 = vperm.xlu0 %938, %v128
    %v940 = vpop.permute.xlu0 %939
    %942 = vset.pattern.permute.xlu0 2
    %943 = vperm.xlu0 %942, %v129
    %v944 = vpop.permute.xlu0 %943
    %946 = vset.pattern.permute.xlu0 2
    %947 = vperm.xlu0 %946, %v130
    %v948 = vpop.permute.xlu0 %947
    %950 = vset.pattern.permute.xlu0 2
    %951 = vperm.xlu0 %950, %v131
    %v952 = vpop.permute.xlu0 %951
    %954 = vset.pattern.permute.xlu0 2
    %955 = vperm.xlu0 %954, %v132
    %v956 = vpop.permute.xlu0 %955
    %958 = vset.pattern.permute.xlu0 2
    %959 = vperm.xlu0 %958, %v133
    %v960 = vpop.permute.xlu0 %959
    %962 = vset.pattern.permute.xlu0 2
    %963 = vperm.xlu0 %962, %v134
    %v964 = vpop.permute.xlu0 %963
    %966 = vset.pattern.permute.xlu0 2
    %967 = vperm.xlu0 %966, %v135
    %v968 = vpop.permute.xlu0 %967
    %970 = vset.pattern.permute.xlu0 2
    %971 = vperm.xlu0 %970, %v136
    %v972 = vpop.permute.xlu0 %971
    %974 = vset.pattern.permute.xlu0 2
    %975 = vperm.xlu0 %974, %v137
    %v976 = vpop.permute.xlu0 %975
    %978 = vset.pattern.permute.xlu0 2
    %979 = vperm.xlu0 %978, %v138
    %v980 = vpop.permute.xlu0 %979
    %982 = vset.pattern.permute.xlu0 2
    %983 = vperm.xlu0 %982, %v139
    %v984 = vpop.permute.xlu0 %983
    %986 = vset.pattern.permute.xlu0 2
    %987 = vperm.xlu0 %986, %v140
    %v988 = vpop.permute.xlu0 %987
    %v1006 = vunpack.c.l.b16 %v109
    %v1007 = vunpack.c.l.b16 %v110
    %v1008 = vunpack.c.l.b16 %v111
    %v1009 = vunpack.c.l.b16 %v112
    %v1010 = vunpack.c.l.b16 %v113
    %v1011 = vunpack.c.l.b16 %v114
    %v1012 = vunpack.c.l.b16 %v115
    %v1013 = vunpack.c.l.b16 %v116
    %v1014 = vunpack.c.l.b16 %v117
    %v1015 = vunpack.c.l.b16 %v118
    %v1016 = vunpack.c.l.b16 %v119
    %v1017 = vunpack.c.l.b16 %v120
    %v1018 = vunpack.c.l.b16 %v121
    %v1019 = vunpack.c.l.b16 %v122
    %v1020 = vunpack.c.l.b16 %v123
    %v1021 = vunpack.c.l.b16 %v124
    %v1022 = vpack.c.b16 %v1007, %v1006
    %v1023 = vpack.c.b16 %v1009, %v1008
    %v1024 = vpack.c.b16 %v1011, %v1010
    %v1025 = vpack.c.b16 %v1013, %v1012
    %v1026 = vpack.c.b16 %v1015, %v1014
    %v1027 = vpack.c.b16 %v1017, %v1016
    %v1028 = vpack.c.b16 %v1019, %v1018
    %v1029 = vpack.c.b16 %v1021, %v1020
    %1038 = vmatprep.subr.bf16.mxu0 0
    %1039 = vmatpush1.bf16.msra.mxu0 %v918
    %1040 = vmatprep.subr.bf16.mxu0 0
    %1041 = vmatpush1.bf16.msra.mxu0 %v919
    %1042 = vmatprep.subr.bf16.mxu0 0
    %1043 = vmatpush1.bf16.msra.mxu0 %v920
    %1044 = vmatprep.subr.bf16.mxu0 0
    %1045 = vmatpush1.bf16.msra.mxu0 %v921
    %1046 = vmatprep.subr.bf16.mxu0 0
    %1047 = vmatpush1.bf16.msra.mxu0 %v922
    %1048 = vmatprep.subr.bf16.mxu0 0
    %1049 = vmatpush1.bf16.msra.mxu0 %v923
    %1050 = vmatprep.subr.bf16.mxu0 0
    %1051 = vmatpush1.bf16.msra.mxu0 %v924
    %1052 = vmatprep.subr.bf16.mxu0 0
    %1053 = vmatpush1.bf16.msra.mxu0 %v925
    %1054 = vmatprep.subr.bf16.mxu0 0
    %1055 = vmatpush1.bf16.msra.mxu0 0
    %1056 = vmatprep.subr.bf16.mxu0 0
    %1057 = vmatpush1.bf16.msra.mxu0 0
    %1058 = vmatprep.subr.bf16.mxu0 0
    %1059 = vmatpush1.bf16.msra.mxu0 0
    %1060 = vmatprep.subr.bf16.mxu0 0
    %1061 = vmatpush1.bf16.msra.mxu0 0
    %1062 = vmatprep.subr.bf16.mxu0 0
    %1063 = vmatpush1.bf16.msra.mxu0 0
    %1064 = vmatprep.subr.bf16.mxu0 0
    %1065 = vmatpush1.bf16.msra.mxu0 0
    %1066 = vmatprep.subr.bf16.mxu0 0
    %1067 = vmatpush1.bf16.msra.mxu0 0
    %1068 = vmatprep.subr.bf16.mxu0 0
    %1069 = vmatpush1.bf16.msra.mxu0 0
    %1070 = vmatprep.mubr.bf16.mxu0 0
    %1071 = vmatmul.mubr.bf16.gmra.mrb[0].mxu0 %v1022
    %v1072 = vpop.f32.mrb[0].mxu0
    %v1073 = vadd.f32 %v928, %v1072
    %v1074 = vpop.f32.mrb[0].mxu0
    %v1075 = vpop.f32.mrb[0].mxu0
    %v1076 = vadd.f32 %v932, %v1075
    %v1077 = vpop.f32.mrb[0].mxu0
    %1078 = vmatprep.mubr.bf16.mxu0 0
    %1079 = vmatmul.mubr.bf16.gmra.mrb[0].mxu0 %v1023
    %v1080 = vpop.f32.mrb[0].mxu0
    %v1081 = vadd.f32 %v936, %v1080
    %v1082 = vpop.f32.mrb[0].mxu0
    %v1083 = vpop.f32.mrb[0].mxu0
    %v1084 = vadd.f32 %v940, %v1083
    %v1085 = vpop.f32.mrb[0].mxu0
    %1086 = vmatprep.mubr.bf16.mxu0 0
    %1087 = vmatmul.mubr.bf16.gmra.mrb[0].mxu0 %v1024
    %v1088 = vpop.f32.mrb[0].mxu0
    %v1089 = vadd.f32 %v944, %v1088
    %v1090 = vpop.f32.mrb[0].mxu0
    %v1091 = vpop.f32.mrb[0].mxu0
    %v1092 = vadd.f32 %v948, %v1091
    %v1093 = vpop.f32.mrb[0].mxu0
    %1094 = vmatprep.mubr.bf16.mxu0 0
    %1095 = vmatmul.mubr.bf16.gmra.mrb[0].mxu0 %v1025
    %v1096 = vpop.f32.mrb[0].mxu0
    %v1097 = vadd.f32 %v952, %v1096
    %v1098 = vpop.f32.mrb[0].mxu0
    %v1099 = vpop.f32.mrb[0].mxu0
    %v1100 = vadd.f32 %v956, %v1099
    %v1101 = vpop.f32.mrb[0].mxu0
    %1102 = vmatprep.mubr.bf16.mxu0 0
    %1103 = vmatmul.mubr.bf16.gmra.mrb[0].mxu0 %v1026
    %v1104 = vpop.f32.mrb[0].mxu0
    %v1105 = vadd.f32 %v960, %v1104
    %v1106 = vpop.f32.mrb[0].mxu0
    %v1107 = vpop.f32.mrb[0].mxu0
    %v1108 = vadd.f32 %v964, %v1107
    %v1109 = vpop.f32.mrb[0].mxu0
    %1110 = vmatprep.mubr.bf16.mxu0 0
    %1111 = vmatmul.mubr.bf16.gmra.mrb[0].mxu0 %v1027
    %v1112 = vpop.f32.mrb[0].mxu0
    %v1113 = vadd.f32 %v968, %v1112
    %v1114 = vpop.f32.mrb[0].mxu0
    %v1115 = vpop.f32.mrb[0].mxu0
    %v1116 = vadd.f32 %v972, %v1115
    %v1117 = vpop.f32.mrb[0].mxu0
    %1118 = vmatprep.mubr.bf16.mxu0 0
    %1119 = vmatmul.mubr.bf16.gmra.mrb[0].mxu0 %v1028
    %v1120 = vpop.f32.mrb[0].mxu0
    %v1121 = vadd.f32 %v976, %v1120
    %v1122 = vpop.f32.mrb[0].mxu0
    %v1123 = vpop.f32.mrb[0].mxu0
    %v1124 = vadd.f32 %v980, %v1123
    %v1125 = vpop.f32.mrb[0].mxu0
    %1126 = vmatprep.mubr.bf16.mxu0 0
    %1127 = vmatmul.mubr.bf16.gmra.mrb[0].mxu0 %v1029
    %v1128 = vpop.f32.mrb[0].mxu0
    %v1129 = vadd.f32 %v984, %v1128
    %v1130 = vpop.f32.mrb[0].mxu0
    %v1131 = vpop.f32.mrb[0].mxu0
    %v1132 = vadd.f32 %v988, %v1131
    %v1133 = vpop.f32.mrb[0].mxu0
    %1134 = vdwg.mxu0
    %v1135 = vmax.f32 %v1073, 0.0
    %v1136 = vmax.f32 %v1076, 0.0
    %v1137 = vmax.f32 %v1081, 0.0
    %v1138 = vmax.f32 %v1084, 0.0
    %v1139 = vmax.f32 %v1089, 0.0
    %v1140 = vmax.f32 %v1092, 0.0
    %v1141 = vmax.f32 %v1097, 0.0
    %v1142 = vmax.f32 %v1100, 0.0
    %v1143 = vmax.f32 %v1105, 0.0
    %v1144 = vmax.f32 %v1108, 0.0
    %v1145 = vmax.f32 %v1113, 0.0
    %v1146 = vmax.f32 %v1116, 0.0
    %v1147 = vmax.f32 %v1121, 0.0
    %v1148 = vmax.f32 %v1124, 0.0
    %v1149 = vmax.f32 %v1129, 0.0
    %v1150 = vmax.f32 %v1132, 0.0
    %v1151 = vmul.f32 %v141, %v334
    %v1152 = vmul.f32 %v142, %v337
    %v1153 = vmul.f32 %v143, %v342
    %v1154 = vmul.f32 %v144, %v345
    %v1155 = vmul.f32 %v145, %v350
    %v1156 = vmul.f32 %v146, %v353
    %v1157 = vmul.f32 %v147, %v358
    %v1158 = vmul.f32 %v148, %v361
    %v1159 = vmul.f32 %v149, %v366
    %v1160 = vmul.f32 %v150, %v369
    %v1161 = vmul.f32 %v151, %v374
    %v1162 = vmul.f32 %v152, %v377
    %v1163 = vmul.f32 %v153, %v382
    %v1164 = vmul.f32 %v154, %v385
    %v1165 = vmul.f32 %v155, %v390
    %v1166 = vmul.f32 %v156, %v393
    %1167 = vset.pattern.permute.xlu0 3
    %1168 = vperm.xlu0 %1167, %v125
    %v1169 = vpop.permute.xlu0 %1168
    %1171 = vset.pattern.permute.xlu0 3
    %1172 = vperm.xlu0 %1171, %v126
    %v1173 = vpop.permute.xlu0 %1172
    %1175 = vset.pattern.permute.xlu0 3
    %1176 = vperm.xlu0 %1175, %v127
    %v1177 = vpop.permute.xlu0 %1176
    %1179 = vset.pattern.permute.xlu0 3
    %1180 = vperm.xlu0 %1179, %v128
    %v1181 = vpop.permute.xlu0 %1180
    %1183 = vset.pattern.permute.xlu0 3
    %1184 = vperm.xlu0 %1183, %v129
    %v1185 = vpop.permute.xlu0 %1184
    %1187 = vset.pattern.permute.xlu0 3
    %1188 = vperm.xlu0 %1187, %v130
    %v1189 = vpop.permute.xlu0 %1188
    %1191 = vset.pattern.permute.xlu0 3
    %1192 = vperm.xlu0 %1191, %v131
    %v1193 = vpop.permute.xlu0 %1192
    %1195 = vset.pattern.permute.xlu0 3
    %1196 = vperm.xlu0 %1195, %v132
    %v1197 = vpop.permute.xlu0 %1196
    %1199 = vset.pattern.permute.xlu0 3
    %1200 = vperm.xlu0 %1199, %v133
    %v1201 = vpop.permute.xlu0 %1200
    %1203 = vset.pattern.permute.xlu0 3
    %1204 = vperm.xlu0 %1203, %v134
    %v1205 = vpop.permute.xlu0 %1204
    %1207 = vset.pattern.permute.xlu0 3
    %1208 = vperm.xlu0 %1207, %v135
    %v1209 = vpop.permute.xlu0 %1208
    %1211 = vset.pattern.permute.xlu0 3
    %1212 = vperm.xlu0 %1211, %v136
    %v1213 = vpop.permute.xlu0 %1212
    %1215 = vset.pattern.permute.xlu0 3
    %1216 = vperm.xlu0 %1215, %v137
    %v1217 = vpop.permute.xlu0 %1216
    %1219 = vset.pattern.permute.xlu0 3
    %1220 = vperm.xlu0 %1219, %v138
    %v1221 = vpop.permute.xlu0 %1220
    %1223 = vset.pattern.permute.xlu0 3
    %1224 = vperm.xlu0 %1223, %v139
    %v1225 = vpop.permute.xlu0 %1224
    %1227 = vset.pattern.permute.xlu0 3
    %1228 = vperm.xlu0 %1227, %v140
    %v1229 = vpop.permute.xlu0 %1228
    %v1231 = vmul.f32 %v1151, %v1169
    %v1232 = vmul.f32 %v1152, %v1173
    %v1233 = vmul.f32 %v1153, %v1177
    %v1234 = vmul.f32 %v1154, %v1181
    %v1235 = vmul.f32 %v1155, %v1185
    %v1236 = vmul.f32 %v1156, %v1189
    %v1237 = vmul.f32 %v1157, %v1193
    %v1238 = vmul.f32 %v1158, %v1197
    %v1239 = vmul.f32 %v1159, %v1201
    %v1240 = vmul.f32 %v1160, %v1205
    %v1241 = vmul.f32 %v1161, %v1209
    %v1242 = vmul.f32 %v1162, %v1213
    %v1243 = vmul.f32 %v1163, %v1217
    %v1244 = vmul.f32 %v1164, %v1221
    %v1245 = vmul.f32 %v1165, %v1225
    %v1246 = vmul.f32 %v1166, %v1229
    %1247 = vset.pattern.permute.xlu0 4
    %1248 = vperm.xlu0 %1247, %v125
    %v1249 = vpop.permute.xlu0 %1248
    %1251 = vset.pattern.permute.xlu0 4
    %1252 = vperm.xlu0 %1251, %v126
    %v1253 = vpop.permute.xlu0 %1252
    %1255 = vset.pattern.permute.xlu0 4
    %1256 = vperm.xlu0 %1255, %v127
    %v1257 = vpop.permute.xlu0 %1256
    %1259 = vset.pattern.permute.xlu0 4
    %1260 = vperm.xlu0 %1259, %v128
    %v1261 = vpop.permute.xlu0 %1260
    %1263 = vset.pattern.permute.xlu0 4
    %1264 = vperm.xlu0 %1263, %v129
    %v1265 = vpop.permute.xlu0 %1264
    %1267 = vset.pattern.permute.xlu0 4
    %1268 = vperm.xlu0 %1267, %v130
    %v1269 = vpop.permute.xlu0 %1268
    %1271 = vset.pattern.permute.xlu0 4
    %1272 = vperm.xlu0 %1271, %v131
    %v1273 = vpop.permute.xlu0 %1272
    %1275 = vset.pattern.permute.xlu0 4
    %1276 = vperm.xlu0 %1275, %v132
    %v1277 = vpop.permute.xlu0 %1276
    %1279 = vset.pattern.permute.xlu0 4
    %1280 = vperm.xlu0 %1279, %v133
    %v1281 = vpop.permute.xlu0 %1280
    %1283 = vset.pattern.permute.xlu0 4
    %1284 = vperm.xlu0 %1283, %v134
    %v1285 = vpop.permute.xlu0 %1284
    %1287 = vset.pattern.permute.xlu0 4
    %1288 = vperm.xlu0 %1287, %v135
    %v1289 = vpop.permute.xlu0 %1288
    %1291 = vset.pattern.permute.xlu0 4
    %1292 = vperm.xlu0 %1291, %v136
    %v1293 = vpop.permute.xlu0 %1292
    %1295 = vset.pattern.permute.xlu0 4
    %1296 = vperm.xlu0 %1295, %v137
    %v1297 = vpop.permute.xlu0 %1296
    %1299 = vset.pattern.permute.xlu0 4
    %1300 = vperm.xlu0 %1299, %v138
    %v1301 = vpop.permute.xlu0 %1300
    %1303 = vset.pattern.permute.xlu0 4
    %1304 = vperm.xlu0 %1303, %v139
    %v1305 = vpop.permute.xlu0 %1304
    %1307 = vset.pattern.permute.xlu0 4
    %1308 = vperm.xlu0 %1307, %v140
    %v1309 = vpop.permute.xlu0 %1308
    %v1311 = vmul.f32 %v1135, %v1249
    %v1312 = vmul.f32 %v1136, %v1253
    %v1313 = vmul.f32 %v1137, %v1257
    %v1314 = vmul.f32 %v1138, %v1261
    %v1315 = vmul.f32 %v1139, %v1265
    %v1316 = vmul.f32 %v1140, %v1269
    %v1317 = vmul.f32 %v1141, %v1273
    %v1318 = vmul.f32 %v1142, %v1277
    %v1319 = vmul.f32 %v1143, %v1281
    %v1320 = vmul.f32 %v1144, %v1285
    %v1321 = vmul.f32 %v1145, %v1289
    %v1322 = vmul.f32 %v1146, %v1293
    %v1323 = vmul.f32 %v1147, %v1297
    %v1324 = vmul.f32 %v1148, %v1301
    %v1325 = vmul.f32 %v1149, %v1305
    %v1326 = vmul.f32 %v1150, %v1309
    %v1327 = vadd.f32 %v1231, %v1311
    %v1328 = vadd.f32 %v1232, %v1312
    %v1329 = vadd.f32 %v1233, %v1313
    %v1330 = vadd.f32 %v1234, %v1314
    %v1331 = vadd.f32 %v1235, %v1315
    %v1332 = vadd.f32 %v1236, %v1316
    %v1333 = vadd.f32 %v1237, %v1317
    %v1334 = vadd.f32 %v1238, %v1318
    %v1335 = vadd.f32 %v1239, %v1319
    %v1336 = vadd.f32 %v1240, %v1320
    %v1337 = vadd.f32 %v1241, %v1321
    %v1338 = vadd.f32 %v1242, %v1322
    %v1339 = vadd.f32 %v1243, %v1323
    %v1340 = vadd.f32 %v1244, %v1324
    %v1341 = vadd.f32 %v1245, %v1325
    %v1342 = vadd.f32 %v1246, %v1326
    %v1343 = vadd.f32 %v1327, %v1328
    %v1344 = vadd.f32 %v1343, %v1329
    %v1345 = vadd.f32 %v1344, %v1330
    %v1346 = vadd.f32 %v1345, %v1331
    %v1347 = vadd.f32 %v1346, %v1332
    %v1348 = vadd.f32 %v1347, %v1333
    %v1349 = vadd.f32 %v1348, %v1334
    %v1350 = vadd.f32 %v1349, %v1335
    %v1351 = vadd.f32 %v1350, %v1336
    %v1352 = vadd.f32 %v1351, %v1337
    %v1353 = vadd.f32 %v1352, %v1338
    %v1354 = vadd.f32 %v1353, %v1339
    %v1355 = vadd.f32 %v1354, %v1340
    %v1356 = vadd.f32 %v1355, %v1341
    %v1357 = vadd.f32 %v1356, %v1342
    %v1358 = vrot.slane %v1357, 4
    %v1359 = vadd.f32 %v1357, %v1358
    %v1360 = vrot.slane %v1359, 2
    %v1361 = vadd.f32 %v1359, %v1360
    %v1362 = vrot.slane %v1361, 1
    %v1363 = vadd.f32 %v1361, %v1362
    %1364 = vset.pattern.permute.xlu0 5
    %1365 = vperm.xlu0 %1364, %v125
    %v1366 = vpop.permute.xlu0 %1365
    %v1368 = vadd.f32 %v1363, %v1366
    %1369 = vst [vmem:[#allocation10] sm:$0x1] %v1368
    // Predicated region
    $region38: #{tpu_custom_call.1} parent=1 // pred_check
      _
    $region39: #{tpu_custom_call.1} parent=1 // pred_check_branch
      %1371 = sbr.rel (0) target = $region41
    $region40: #{tpu_custom_call.1} parent=1 // pred_region
      %s1373 = ssub.s32 16, 16
      %1374 = vsyncadd [#allocation4], %s1373
      %s1376 = sshll.u32 [#allocation10], 4
      %s1377 = int_to_ptr.vmem [resolvable:$true] %s1376
      %1379 = dma.vmem_to_hbm [thread:$0]  %s1377, 16, %s5, [#allocation4]
    $region41: #{tpu_custom_call.1} parent=1 // pred_fallthru
      _
    // Predicated region
    $region42: #{tpu_custom_call.1} parent=1 // pred_check
      _
    $region43: #{tpu_custom_call.1} parent=1 // pred_check_branch
      %1381 = sbr.rel (0) target = $region45
    $region44: #{tpu_custom_call.1} parent=1 // pred_region
      %1382 = dma.done [#allocation4], 16
    $region45: #{tpu_custom_call.1} parent=1 // pred_fallthru
      _
    %1383 = vsyncpa [#allocation3], 1
    %1384 = vsyncpa [#allocation6], 1
    %1385 = vsyncpa [#allocation9], 1
    %1386 = vsyncpa [#allocation4], 1

</llo_original>
